<compile_context>
chip_gen: v7x
topology: tpu7x:2x2x1
jax: 0.10.0
libtpu: 0.0.40
codegen_flags: <defaults>
</compile_context>

<pallas_src>
import functools

import jax
import jax.numpy as jnp
from jax import lax
from jax.experimental import pallas as pl
from jax.experimental.pallas import tpu as pltpu


# --------------------------- kernel 1: QKV projection ------------------------
def qkv_proj_kernel(x_ref, w_ref, o_ref):
    # x_ref: (TM, D) f32 tile, w_ref: (D, 3*inner) bf16 (whole array resident in VMEM)
    # TODO(synk): accept bf16 activations from upstream to halve the x DMA bytes.
    o_ref[...] = jnp.dot(
        x_ref[...].astype(jnp.bfloat16),
        w_ref[...],
        preferred_element_type=jnp.float32,
    ).astype(o_ref.dtype)


# ------------------- kernel 2: attention + output projection -----------------
def attention_kernel(q_ref, k_ref, v_ref, wo_ref, bo_ref, o_ref, pv_ref, *,
                     heads, dim_head, scale):
    # q_ref : (1, H, TQ, dh) bf16   one q-tile, all heads of one batch element
    # k_ref : (1, H, N,  dh) bf16   full-length K (block index depends only on b
    # v_ref : (1, H, N,  dh) bf16    -> fetched once per batch element)
    # wo_ref: (inner, D)     bf16   whole output projection, VMEM resident
    # bo_ref: (1, D)         f32    VMEM resident
    # pv_ref: (TQ, inner)    bf16   scratch: per-head attn@v packed along lanes
    for h in range(heads):
        # fold the softmax scale into the small (TQ, dh) q tile (f32 mul; exact
        # for power-of-4 dim_head such as 64) instead of the (TQ, N) dots tile.
        q = (q_ref[0, h].astype(jnp.float32) * scale).astype(jnp.bfloat16)
        k = k_ref[0, h]                       # (N, dh) bf16
        v = v_ref[0, h]                       # (N, dh) bf16

        # q @ k^T without an explicit transpose: contract last dim with last dim.
        dots = lax.dot_general(
            q, k, (((1,), (1,)), ((), ())),
            preferred_element_type=jnp.float32,
        )                                                     # (TQ, N) f32

        # numerically-stable softmax in f32; denominator via EUP approx reciprocal
        dots = dots - jnp.max(dots, axis=-1, keepdims=True)
        e = jnp.exp(dots)
        attn = e * pl.reciprocal(jnp.sum(e, axis=-1, keepdims=True), approx=True)

        pv = jnp.dot(attn.astype(jnp.bfloat16), v,
                     preferred_element_type=jnp.float32)      # (TQ, dh) f32
        pv_ref[:, h * dim_head:(h + 1) * dim_head] = pv.astype(jnp.bfloat16)

    # One wide output projection: contraction = inner = heads*dim_head fills the
    # MXU (vs 25% width with per-head dh=64 contractions) and removes the per-head
    # (TQ, D) f32 accumulator read-modify-write.
    out = jnp.dot(pv_ref[...], wo_ref[...], preferred_element_type=jnp.float32)
    o_ref[0] = (out + bo_ref[...]).astype(o_ref.dtype)        # lane-dense (TQ, D)


# ----------------------------------- helpers ---------------------------------
def _vmem_budget_bytes():
    """VMEM budget derived from the actual chip, with headroom for the compiler."""
    try:
        cap = int(pltpu.get_tpu_info().vmem_capacity_bytes)
    except Exception:
        cap = 64 * 1024 * 1024          # conservative: v7x physical VMEM per core
    return min((cap * 3) // 4, 96 * 1024 * 1024)


def _pick_tile(total, candidates, max_tile):
    """Largest candidate that divides `total` and fits the VMEM-derived cap."""
    for c in candidates:
        if c <= max_tile and total % c == 0:
            return c
    # any multiple of 8 that divides total and fits the cap
    best = 0
    upper = min(total, max(8, int(max_tile)))
    for c in range(8, upper + 1, 8):
        if total % c == 0:
            best = c
    if best:
        return best
    # TODO(synk): pad + mask instead of falling back to the full (possibly large) extent.
    return total


# ----------------------------------- wrapper ---------------------------------
def attention_forward(x, params, *, heads, dim_head):
    """Pallas forward pass of the Attention module. x: (B, N, D) float32."""
    B, N, D = x.shape
    inner = heads * dim_head
    budget = _vmem_budget_bytes()

    wqkv = params["wqkv"].astype(jnp.bfloat16)        # (D, 3*inner)
    wo = params["wo"].astype(jnp.bfloat16)            # (inner, D)
    bo = params["bo"].astype(jnp.float32)             # (1, D)

    # ---- stage 1: fused QKV projection over row tiles (HBM-bound: big tiles) ----
    BN = B * N
    wqkv_bytes = D * 3 * inner * 2
    row_bytes = 2 * (D * 4 + 3 * inner * 2)           # x f32 + out bf16, double-buffered
    max_tm = max(8, (budget - wqkv_bytes) // row_bytes)
    TM = _pick_tile(BN, (2048, 1024, 512, 256, 128, 64, 32, 16, 8), max_tm)
    x2 = x.reshape(BN, D)

    qkv = pl.pallas_call(
        qkv_proj_kernel,
        out_shape=jax.ShapeDtypeStruct((BN, 3 * inner), jnp.bfloat16),
        grid_spec=pltpu.PrefetchScalarGridSpec(
            num_scalar_prefetch=0,
            grid=(BN // TM,),
            in_specs=[
                pl.BlockSpec((TM, D), lambda i: (i, 0)),
                # weight resident once in VMEM (single copy, not double-buffered)
                pl.BlockSpec(memory_space=pltpu.MemorySpace.VMEM),
            ],
            out_specs=pl.BlockSpec((TM, 3 * inner), lambda i: (i, 0)),
        ),
        compiler_params=pltpu.CompilerParams(
            dimension_semantics=("parallel",),
            vmem_limit_bytes=budget,
        ),
    )(x2, wqkv)

    # ---- layout plumbing: one transpose 'b n (3 h d)' -> (3, b*h, n, d) ----------
    # A single transpose op instead of three; the same array is bound to the three
    # q/k/v BlockSpecs below (no extra slices materialized).
    # TODO(synk): eliminate this relayout entirely (e.g. stage 1 emitting per-head
    # outputs) once measured against the narrow-MXU-output cost of doing so.
    qkvt = jnp.transpose(
        qkv.reshape(B, N, 3, heads, dim_head), (2, 0, 3, 1, 4)
    ).reshape(3, B * heads, N, dim_head)

    # ---- stage 2: all heads per grid step; K/V fetched once per batch element ----
    out_itemsize = jnp.dtype(x.dtype).itemsize
    kv_bytes = 2 * 2 * heads * N * dim_head * 2        # K+V blocks, double-buffered, bf16
    wo_bytes = inner * D * 2 + D * 4                   # resident wo + bo
    per_row = (2 * heads * dim_head * 2                # q tile (double-buffered) bf16
               + 2 * D * out_itemsize                  # output tile (double-buffered)
               + inner * 2                             # pv scratch bf16
               + 3 * N * 4)                            # transient f32 dots/exp tiles
    max_tq = max(8, (budget - kv_bytes - wo_bytes) // per_row)
    TQ = _pick_tile(N, (1024, 512, 256, 128, 64, 32, 16, 8), max_tq)

    scale = dim_head ** -0.5
    kernel = functools.partial(attention_kernel, heads=heads, dim_head=dim_head,
                               scale=scale)

    out = pl.pallas_call(
        kernel,
        out_shape=jax.ShapeDtypeStruct((B, N, D), x.dtype),
        grid_spec=pltpu.PrefetchScalarGridSpec(
            num_scalar_prefetch=0,
            grid=(B, N // TQ),
            in_specs=[
                pl.BlockSpec((1, heads, TQ, dim_head), lambda b, qi: (0, b, qi, 0)),  # q
                pl.BlockSpec((1, heads, N, dim_head), lambda b, qi: (1, b, 0, 0)),    # k
                pl.BlockSpec((1, heads, N, dim_head), lambda b, qi: (2, b, 0, 0)),    # v
                pl.BlockSpec(memory_space=pltpu.MemorySpace.VMEM),                    # wo
                pl.BlockSpec(memory_space=pltpu.MemorySpace.VMEM),                    # bo
            ],
            out_specs=pl.BlockSpec((1, TQ, D), lambda b, qi: (b, qi, 0)),
            scratch_shapes=[pltpu.VMEM((TQ, inner), jnp.bfloat16)],
        ),
        compiler_params=pltpu.CompilerParams(
            # q-tile axis kept sequential ("arbitrary") so the unchanged K/V block
            # index across consecutive steps skips the K/V re-DMA within a batch.
            dimension_semantics=("parallel", "arbitrary"),
            vmem_limit_bytes=budget,
        ),
    )(qkvt, qkvt, qkvt, wo, bo)
    return out


# ------------------------------ pure-JAX reference ---------------------------
def reference_attention(x, params, *, heads, dim_head):
    B, N, D = x.shape
    inner = heads * dim_head
    scale = dim_head ** -0.5
    qkv = x @ params["wqkv"]
    q, k, v = jnp.split(qkv, 3, axis=-1)

    def split_heads(t):
        return t.reshape(B, N, heads, dim_head).transpose(0, 2, 1, 3)

    q, k, v = map(split_heads, (q, k, v))
    dots = jnp.einsum("bhnd,bhmd->bhnm", q, k) * scale
    attn = jax.nn.softmax(dots, axis=-1)
    out = jnp.einsum("bhnm,bhmd->bhnd", attn, v)
    out = out.transpose(0, 2, 1, 3).reshape(B, N, inner)
    return out @ params["wo"] + params["bo"][0]


# ------------------------------------ main ------------------------------------
if __name__ == "__main__":
    # Small but lane-friendly shapes: D and inner multiples of 128, N multiple of 8.
    B, N = 2, 16
    dim, heads, dim_head = 128, 8, 64        # module defaults heads=8, dim_head=64
    inner = heads * dim_head                 # project_out == True for this config

    key = jax.random.PRNGKey(0)
    kx, kw1, kw2, kb = jax.random.split(key, 4)
    x = jax.random.normal(kx, (B, N, dim), jnp.float32)
    params = {
        "wqkv": jax.random.normal(kw1, (dim, 3 * inner), jnp.float32) * 0.05,
        "wo": jax.random.normal(kw2, (inner, dim), jnp.float32) * 0.05,
        "bo": jax.random.normal(kb, (1, dim), jnp.float32) * 0.05,
    }

    out = attention_forward(x, params, heads=heads, dim_head=dim_head)
    out = jax.block_until_ready(out)

    ref = reference_attention(x, params, heads=heads, dim_head=dim_head)
    assert out.shape == (B, N, dim)
    max_err = float(jnp.max(jnp.abs(out - ref)))
    # bf16 matmul operands + approx reciprocal => loosened tolerance vs f32 reference
    assert jnp.allclose(out, ref, rtol=2e-2, atol=2e-2), \
        f"mismatch vs reference (max abs err {max_err})"

    print("KERNEL_OK")
</pallas_src>

<mosaic_0001>
module attributes {stable_mosaic.version = 11 : i64} {
  func.func @qkv_proj_kernel(%arg0: i32, %arg1: memref<32x128xf32, #tpu.memory_space<vmem>>, %arg2: memref<128x1536xbf16, #tpu.memory_space<vmem>>, %arg3: memref<32x1536xbf16, #tpu.memory_space<vmem>>) attributes {dimension_semantics = [#tpu.dimension_semantics<parallel>], iteration_bounds = array<i64: 1>, scalar_prefetch = 0 : i64, scratch_operands = 0 : i64, tpu.core_type = #tpu.core_type<tc>, window_params = [{transform_indices = @transform_0, window_bounds = array<i64: 32, 128>}, {pipeline_mode = #tpu.pipeline_mode<synchronous>, transform_indices = @transform_1, window_bounds = array<i64: 128, 1536>}, {transform_indices = @transform_2, window_bounds = array<i64: 32, 1536>}]} {
    %c0 = arith.constant 0 : index
    %c0_0 = arith.constant 0 : index
    %0 = vector.load %arg1[%c0, %c0_0] : memref<32x128xf32, #tpu.memory_space<vmem>>, vector<32x128xf32>
    %1 = arith.truncf %0 : vector<32x128xf32> to vector<32x128xbf16>
    %c0_1 = arith.constant 0 : index
    %c0_2 = arith.constant 0 : index
    %2 = vector.load %arg2[%c0_1, %c0_2] : memref<128x1536xbf16, #tpu.memory_space<vmem>>, vector<128x1536xbf16>
    %cst = arith.constant dense<0.000000e+00> : vector<32x1536xf32>
    %3 = tpu.matmul %1, %2, %cst {dimension_numbers = #tpu.dot_dimension_numbers<[1], [0], [0], [1], [0, 0, 1, 1], [], []>} : vector<32x128xbf16>, vector<128x1536xbf16>, vector<32x1536xf32> -> vector<32x1536xf32>
    %4 = arith.truncf %3 : vector<32x1536xf32> to vector<32x1536xbf16>
    %c0_3 = arith.constant 0 : index
    %c0_4 = arith.constant 0 : index
    %5 = vector.load %arg3[%c0_3, %c0_4] : memref<32x1536xbf16, #tpu.memory_space<vmem>>, vector<32x1536xbf16>
    tpu.vector_store %arg3[%c0_3, %c0_4], %4 {strides = array<i32>} : memref<32x1536xbf16, #tpu.memory_space<vmem>>, vector<32x1536xbf16>,
    return
  }
  func.func @transform_0(%arg0: i32) -> (i32, i32) {
    %c0_i32 = arith.constant 0 : i32
    %c0_i32_0 = arith.constant 0 : i32
    return %arg0, %c0_i32 : i32, i32
  }
  func.func @transform_1(%arg0: i32) -> (i32, i32) {
    %c0_i32 = arith.constant 0 : i32
    %c0_i32_0 = arith.constant 0 : i32
    %c0_i32_1 = arith.constant 0 : i32
    return %c0_i32, %c0_i32_0 : i32, i32
  }
  func.func @transform_2(%arg0: i32) -> (i32, i32) {
    %c0_i32 = arith.constant 0 : i32
    %c0_i32_0 = arith.constant 0 : i32
    return %arg0, %c0_i32 : i32, i32
  }
}

</mosaic_0001>

<llo_original>
// kernel: tpu_custom_call.1
$region0: #{tpu_custom_call.1}
  #allocation0 [shape = 'u32[]', space=smem, size = 0x4, offset = 0x4, fixed_abs, tag = 'smem constant byte address 0x4 - core index']
  #allocation1 [shape = 'u32[144,128]{1,0:T(1,128)}', space=vmem, size = 0x12000, scoped, tag = 'internal scratch']
  %s0 = inlined_call_operand.hbm [shape: f32[32,128], index: 0, kind: input, shape index: {}]
  %s1 = inlined_call_operand.hbm [shape: bf16[128,1536], index: 1, kind: input, shape index: {}]
  %s2 = inlined_call_operand.hbm [shape: bf16[32,1536], index: 2, kind: output, shape index: {}]
  %s3 = sld [smem:[#allocation0]]
  $region26: #{tpu_custom_call.1} parent=0
    _
  %s5 = ssub.s32 1, %s3
  %s6 = scalar_select 0, %s5, %s3
  $region1: #{tpu_custom_call.1} parent=0
    #allocation2 [shape = 'u8[16384]{0}', space=vmem, size = 0x4000, scoped, tag = 'input window, operand 0, single buffered']
    #allocation3 [shape = 's32[1]{0}', space=sflag, size = 0x4, scoped, tag = 'scoped memory for tpu_custom_call.1']
    #allocation4 [shape = 's32[1]{0}', space=sflag, size = 0x4, scoped, tag = 'scoped memory for tpu_custom_call.1']
    #allocation5 [shape = 'u8[393216]{0}', space=vmem, size = 0x60000, scoped, tag = 'input window, operand 1, single buffered']
    #allocation6 [shape = 's32[1]{0}', space=sflag, size = 0x4, scoped, tag = 'scoped memory for tpu_custom_call.1']
    #allocation7 [shape = 'u8[98304]{0}', space=vmem, size = 0x18000, scoped, tag = 'output window, operand 0, single buffered']
    %7 = vsyncpa [#allocation3], 0
    %8 = vsyncpa [#allocation6], 0
    %9 = vsyncpa [#allocation4], 0
    // Predicated region
    $region2: #{tpu_custom_call.1} parent=1 // pred_check
      _
    $region3: #{tpu_custom_call.1} parent=1 // pred_check_branch
      %11 = sbr.rel (0) target = $region5
    $region4: #{tpu_custom_call.1} parent=1 // pred_region
      %s13 = ssub.s32 512, 512
      %14 = vsyncadd [#allocation3], %s13
      %s15 = sshll.u32 [#allocation2], 4
      %s16 = int_to_ptr.vmem [resolvable:$true] %s15
      %21 = dma.hbm_to_vmem [thread:$0]  %s0, 512, %s16, [#allocation3], 128, 128, 8
    $region5: #{tpu_custom_call.1} parent=1 // pred_fallthru
      _
    // Predicated region
    $region6: #{tpu_custom_call.1} parent=1 // pred_check
      _
    $region7: #{tpu_custom_call.1} parent=1 // pred_check_branch
      %23 = sbr.rel (0) target = $region9
    $region8: #{tpu_custom_call.1} parent=1 // pred_region
      %s25 = ssub.s32 12288, 12288
      %26 = vsyncadd [#allocation6], %s25
      %s27 = sshll.u32 [#allocation5], 4
      %s28 = int_to_ptr.vmem [resolvable:$true] %s27
      %33 = dma.hbm_to_vmem [thread:$0]  %s1, 12288, %s28, [#allocation6], 768, 768, 48
    $region9: #{tpu_custom_call.1} parent=1 // pred_fallthru
      _
    // Predicated region
    $region10: #{tpu_custom_call.1} parent=1 // pred_check
      _
    $region11: #{tpu_custom_call.1} parent=1 // pred_check_branch
      %35 = sbr.rel (0) target = $region13
    $region12: #{tpu_custom_call.1} parent=1 // pred_region
      %36 = dma.done [#allocation3], 512
    $region13: #{tpu_custom_call.1} parent=1 // pred_fallthru
      _
    // Predicated region
    $region14: #{tpu_custom_call.1} parent=1 // pred_check
      _
    $region15: #{tpu_custom_call.1} parent=1 // pred_check_branch
      %38 = sbr.rel (0) target = $region17
    $region16: #{tpu_custom_call.1} parent=1 // pred_region
      %39 = dma.done [#allocation6], 12288
    $region17: #{tpu_custom_call.1} parent=1 // pred_fallthru
      _
    %v41 = vld [vmem:[#allocation2] sm:$0xff]
    %v42 = vld [vmem:[#allocation2 + $0x8] sm:$0xff]
    %v43 = vld [vmem:[#allocation2 + $0x10] sm:$0xff]
    %v44 = vld [vmem:[#allocation2 + $0x18] sm:$0xff]
    %v45 = vpack.c.bf16 %v42, %v41
    %v46 = vpack.c.bf16 %v44, %v43
    %v47 = vld [vmem:[#allocation5] sm:$0xff]
    %v48 = vld [vmem:[#allocation5 + $0x8] sm:$0xff]
    %v49 = vld [vmem:[#allocation5 + $0x10] sm:$0xff]
    %v50 = vld [vmem:[#allocation5 + $0x18] sm:$0xff]
    %v51 = vld [vmem:[#allocation5 + $0x20] sm:$0xff]
    %v52 = vld [vmem:[#allocation5 + $0x28] sm:$0xff]
    %v53 = vld [vmem:[#allocation5 + $0x30] sm:$0xff]
    %v54 = vld [vmem:[#allocation5 + $0x38] sm:$0xff]
    %v55 = vld [vmem:[#allocation5 + $0x40] sm:$0xff]
    %v56 = vld [vmem:[#allocation5 + $0x48] sm:$0xff]
    %v57 = vld [vmem:[#allocation5 + $0x50] sm:$0xff]
    %v58 = vld [vmem:[#allocation5 + $0x58] sm:$0xff]
    %v59 = vld [vmem:[#allocation5 + $0x60] sm:$0xff]
    %v60 = vld [vmem:[#allocation5 + $0x68] sm:$0xff]
    %v61 = vld [vmem:[#allocation5 + $0x70] sm:$0xff]
    %v62 = vld [vmem:[#allocation5 + $0x78] sm:$0xff]
    %v63 = vld [vmem:[#allocation5 + $0x80] sm:$0xff]
    %v64 = vld [vmem:[#allocation5 + $0x88] sm:$0xff]
    %v65 = vld [vmem:[#allocation5 + $0x90] sm:$0xff]
    %v66 = vld [vmem:[#allocation5 + $0x98] sm:$0xff]
    %v67 = vld [vmem:[#allocation5 + $0xa0] sm:$0xff]
    %v68 = vld [vmem:[#allocation5 + $0xa8] sm:$0xff]
    %v69 = vld [vmem:[#allocation5 + $0xb0] sm:$0xff]
    %v70 = vld [vmem:[#allocation5 + $0xb8] sm:$0xff]
    %v71 = vld [vmem:[#allocation5 + $0xc0] sm:$0xff]
    %v72 = vld [vmem:[#allocation5 + $0xc8] sm:$0xff]
    %v73 = vld [vmem:[#allocation5 + $0xd0] sm:$0xff]
    %v74 = vld [vmem:[#allocation5 + $0xd8] sm:$0xff]
    %v75 = vld [vmem:[#allocation5 + $0xe0] sm:$0xff]
    %v76 = vld [vmem:[#allocation5 + $0xe8] sm:$0xff]
    %v77 = vld [vmem:[#allocation5 + $0xf0] sm:$0xff]
    %v78 = vld [vmem:[#allocation5 + $0xf8] sm:$0xff]
    %v79 = vld [vmem:[#allocation5 + $0x100] sm:$0xff]
    %v80 = vld [vmem:[#allocation5 + $0x108] sm:$0xff]
    %v81 = vld [vmem:[#allocation5 + $0x110] sm:$0xff]
    %v82 = vld [vmem:[#allocation5 + $0x118] sm:$0xff]
    %v83 = vld [vmem:[#allocation5 + $0x120] sm:$0xff]
    %v84 = vld [vmem:[#allocation5 + $0x128] sm:$0xff]
    %v85 = vld [vmem:[#allocation5 + $0x130] sm:$0xff]
    %v86 = vld [vmem:[#allocation5 + $0x138] sm:$0xff]
    %v87 = vld [vmem:[#allocation5 + $0x140] sm:$0xff]
    %v88 = vld [vmem:[#allocation5 + $0x148] sm:$0xff]
    %v89 = vld [vmem:[#allocation5 + $0x150] sm:$0xff]
    %v90 = vld [vmem:[#allocation5 + $0x158] sm:$0xff]
    %v91 = vld [vmem:[#allocation5 + $0x160] sm:$0xff]
    %v92 = vld [vmem:[#allocation5 + $0x168] sm:$0xff]
    %v93 = vld [vmem:[#allocation5 + $0x170] sm:$0xff]
    %v94 = vld [vmem:[#allocation5 + $0x178] sm:$0xff]
    %v95 = vld [vmem:[#allocation5 + $0x180] sm:$0xff]
    %v96 = vld [vmem:[#allocation5 + $0x188] sm:$0xff]
    %v97 = vld [vmem:[#allocation5 + $0x190] sm:$0xff]
    %v98 = vld [vmem:[#allocation5 + $0x198] sm:$0xff]
    %v99 = vld [vmem:[#allocation5 + $0x1a0] sm:$0xff]
    %v100 = vld [vmem:[#allocation5 + $0x1a8] sm:$0xff]
    %v101 = vld [vmem:[#allocation5 + $0x1b0] sm:$0xff]
    %v102 = vld [vmem:[#allocation5 + $0x1b8] sm:$0xff]
    %v103 = vld [vmem:[#allocation5 + $0x1c0] sm:$0xff]
    %v104 = vld [vmem:[#allocation5 + $0x1c8] sm:$0xff]
    %v105 = vld [vmem:[#allocation5 + $0x1d0] sm:$0xff]
    %v106 = vld [vmem:[#allocation5 + $0x1d8] sm:$0xff]
    %v107 = vld [vmem:[#allocation5 + $0x1e0] sm:$0xff]
    %v108 = vld [vmem:[#allocation5 + $0x1e8] sm:$0xff]
    %v109 = vld [vmem:[#allocation5 + $0x1f0] sm:$0xff]
    %v110 = vld [vmem:[#allocation5 + $0x1f8] sm:$0xff]
    %v111 = vld [vmem:[#allocation5 + $0x200] sm:$0xff]
    %v112 = vld [vmem:[#allocation5 + $0x208] sm:$0xff]
    %v113 = vld [vmem:[#allocation5 + $0x210] sm:$0xff]
    %v114 = vld [vmem:[#allocation5 + $0x218] sm:$0xff]
    %v115 = vld [vmem:[#allocation5 + $0x220] sm:$0xff]
    %v116 = vld [vmem:[#allocation5 + $0x228] sm:$0xff]
    %v117 = vld [vmem:[#allocation5 + $0x230] sm:$0xff]
    %v118 = vld [vmem:[#allocation5 + $0x238] sm:$0xff]
    %v119 = vld [vmem:[#allocation5 + $0x240] sm:$0xff]
    %v120 = vld [vmem:[#allocation5 + $0x248] sm:$0xff]
    %v121 = vld [vmem:[#allocation5 + $0x250] sm:$0xff]
    %v122 = vld [vmem:[#allocation5 + $0x258] sm:$0xff]
    %v123 = vld [vmem:[#allocation5 + $0x260] sm:$0xff]
    %v124 = vld [vmem:[#allocation5 + $0x268] sm:$0xff]
    %v125 = vld [vmem:[#allocation5 + $0x270] sm:$0xff]
    %v126 = vld [vmem:[#allocation5 + $0x278] sm:$0xff]
    %v127 = vld [vmem:[#allocation5 + $0x280] sm:$0xff]
    %v128 = vld [vmem:[#allocation5 + $0x288] sm:$0xff]
    %v129 = vld [vmem:[#allocation5 + $0x290] sm:$0xff]
    %v130 = vld [vmem:[#allocation5 + $0x298] sm:$0xff]
    %v131 = vld [vmem:[#allocation5 + $0x2a0] sm:$0xff]
    %v132 = vld [vmem:[#allocation5 + $0x2a8] sm:$0xff]
    %v133 = vld [vmem:[#allocation5 + $0x2b0] sm:$0xff]
    %v134 = vld [vmem:[#allocation5 + $0x2b8] sm:$0xff]
    %v135 = vld [vmem:[#allocation5 + $0x2c0] sm:$0xff]
    %v136 = vld [vmem:[#allocation5 + $0x2c8] sm:$0xff]
    %v137 = vld [vmem:[#allocation5 + $0x2d0] sm:$0xff]
    %v138 = vld [vmem:[#allocation5 + $0x2d8] sm:$0xff]
    %v139 = vld [vmem:[#allocation5 + $0x2e0] sm:$0xff]
    %v140 = vld [vmem:[#allocation5 + $0x2e8] sm:$0xff]
    %v141 = vld [vmem:[#allocation5 + $0x2f0] sm:$0xff]
    %v142 = vld [vmem:[#allocation5 + $0x2f8] sm:$0xff]
    %v239 = vunpack.c.l.b16 %v47
    %v240 = vunpack.c.h.b16 %v47
    %v241 = vunpack.c.l.b16 %v48
    %v242 = vunpack.c.h.b16 %v48
    %v243 = vunpack.c.l.b16 %v49
    %v244 = vunpack.c.h.b16 %v49
    %v245 = vunpack.c.l.b16 %v50
    %v246 = vunpack.c.h.b16 %v50
    %v247 = vunpack.c.l.b16 %v51
    %v248 = vunpack.c.h.b16 %v51
    %v249 = vunpack.c.l.b16 %v52
    %v250 = vunpack.c.h.b16 %v52
    %v251 = vunpack.c.l.b16 %v53
    %v252 = vunpack.c.h.b16 %v53
    %v253 = vunpack.c.l.b16 %v54
    %v254 = vunpack.c.h.b16 %v54
    %v255 = vunpack.c.l.b16 %v55
    %v256 = vunpack.c.h.b16 %v55
    %v257 = vunpack.c.l.b16 %v56
    %v258 = vunpack.c.h.b16 %v56
    %v259 = vunpack.c.l.b16 %v57
    %v260 = vunpack.c.h.b16 %v57
    %v261 = vunpack.c.l.b16 %v58
    %v262 = vunpack.c.h.b16 %v58
    %v263 = vunpack.c.l.b16 %v59
    %v264 = vunpack.c.h.b16 %v59
    %v265 = vunpack.c.l.b16 %v60
    %v266 = vunpack.c.h.b16 %v60
    %v267 = vunpack.c.l.b16 %v61
    %v268 = vunpack.c.h.b16 %v61
    %v269 = vunpack.c.l.b16 %v62
    %v270 = vunpack.c.h.b16 %v62
    %v271 = vunpack.c.l.b16 %v63
    %v272 = vunpack.c.h.b16 %v63
    %v273 = vunpack.c.l.b16 %v64
    %v274 = vunpack.c.h.b16 %v64
    %v275 = vunpack.c.l.b16 %v65
    %v276 = vunpack.c.h.b16 %v65
    %v277 = vunpack.c.l.b16 %v66
    %v278 = vunpack.c.h.b16 %v66
    %v279 = vunpack.c.l.b16 %v67
    %v280 = vunpack.c.h.b16 %v67
    %v281 = vunpack.c.l.b16 %v68
    %v282 = vunpack.c.h.b16 %v68
    %v283 = vunpack.c.l.b16 %v69
    %v284 = vunpack.c.h.b16 %v69
    %v285 = vunpack.c.l.b16 %v70
    %v286 = vunpack.c.h.b16 %v70
    %v287 = vunpack.c.l.b16 %v71
    %v288 = vunpack.c.h.b16 %v71
    %v289 = vunpack.c.l.b16 %v72
    %v290 = vunpack.c.h.b16 %v72
    %v291 = vunpack.c.l.b16 %v73
    %v292 = vunpack.c.h.b16 %v73
    %v293 = vunpack.c.l.b16 %v74
    %v294 = vunpack.c.h.b16 %v74
    %v295 = vunpack.c.l.b16 %v75
    %v296 = vunpack.c.h.b16 %v75
    %v297 = vunpack.c.l.b16 %v76
    %v298 = vunpack.c.h.b16 %v76
    %v299 = vunpack.c.l.b16 %v77
    %v300 = vunpack.c.h.b16 %v77
    %v301 = vunpack.c.l.b16 %v78
    %v302 = vunpack.c.h.b16 %v78
    %v303 = vunpack.c.l.b16 %v79
    %v304 = vunpack.c.h.b16 %v79
    %v305 = vunpack.c.l.b16 %v80
    %v306 = vunpack.c.h.b16 %v80
    %v307 = vunpack.c.l.b16 %v81
    %v308 = vunpack.c.h.b16 %v81
    %v309 = vunpack.c.l.b16 %v82
    %v310 = vunpack.c.h.b16 %v82
    %v311 = vunpack.c.l.b16 %v83
    %v312 = vunpack.c.h.b16 %v83
    %v313 = vunpack.c.l.b16 %v84
    %v314 = vunpack.c.h.b16 %v84
    %v315 = vunpack.c.l.b16 %v85
    %v316 = vunpack.c.h.b16 %v85
    %v317 = vunpack.c.l.b16 %v86
    %v318 = vunpack.c.h.b16 %v86
    %v319 = vunpack.c.l.b16 %v87
    %v320 = vunpack.c.h.b16 %v87
    %v321 = vunpack.c.l.b16 %v88
    %v322 = vunpack.c.h.b16 %v88
    %v323 = vunpack.c.l.b16 %v89
    %v324 = vunpack.c.h.b16 %v89
    %v325 = vunpack.c.l.b16 %v90
    %v326 = vunpack.c.h.b16 %v90
    %v327 = vunpack.c.l.b16 %v91
    %v328 = vunpack.c.h.b16 %v91
    %v329 = vunpack.c.l.b16 %v92
    %v330 = vunpack.c.h.b16 %v92
    %v331 = vunpack.c.l.b16 %v93
    %v332 = vunpack.c.h.b16 %v93
    %v333 = vunpack.c.l.b16 %v94
    %v334 = vunpack.c.h.b16 %v94
    %v335 = vunpack.c.l.b16 %v95
    %v336 = vunpack.c.h.b16 %v95
    %v337 = vunpack.c.l.b16 %v96
    %v338 = vunpack.c.h.b16 %v96
    %v339 = vunpack.c.l.b16 %v97
    %v340 = vunpack.c.h.b16 %v97
    %v341 = vunpack.c.l.b16 %v98
    %v342 = vunpack.c.h.b16 %v98
    %v343 = vunpack.c.l.b16 %v99
    %v344 = vunpack.c.h.b16 %v99
    %v345 = vunpack.c.l.b16 %v100
    %v346 = vunpack.c.h.b16 %v100
    %v347 = vunpack.c.l.b16 %v101
    %v348 = vunpack.c.h.b16 %v101
    %v349 = vunpack.c.l.b16 %v102
    %v350 = vunpack.c.h.b16 %v102
    %v351 = vunpack.c.l.b16 %v103
    %v352 = vunpack.c.h.b16 %v103
    %v353 = vunpack.c.l.b16 %v104
    %v354 = vunpack.c.h.b16 %v104
    %v355 = vunpack.c.l.b16 %v105
    %v356 = vunpack.c.h.b16 %v105
    %v357 = vunpack.c.l.b16 %v106
    %v358 = vunpack.c.h.b16 %v106
    %v359 = vunpack.c.l.b16 %v107
    %v360 = vunpack.c.h.b16 %v107
    %v361 = vunpack.c.l.b16 %v108
    %v362 = vunpack.c.h.b16 %v108
    %v363 = vunpack.c.l.b16 %v109
    %v364 = vunpack.c.h.b16 %v109
    %v365 = vunpack.c.l.b16 %v110
    %v366 = vunpack.c.h.b16 %v110
    %v367 = vunpack.c.l.b16 %v111
    %v368 = vunpack.c.h.b16 %v111
    %v369 = vunpack.c.l.b16 %v112
    %v370 = vunpack.c.h.b16 %v112
    %v371 = vunpack.c.l.b16 %v113
    %v372 = vunpack.c.h.b16 %v113
    %v373 = vunpack.c.l.b16 %v114
    %v374 = vunpack.c.h.b16 %v114
    %v375 = vunpack.c.l.b16 %v115
    %v376 = vunpack.c.h.b16 %v115
    %v377 = vunpack.c.l.b16 %v116
    %v378 = vunpack.c.h.b16 %v116
    %v379 = vunpack.c.l.b16 %v117
    %v380 = vunpack.c.h.b16 %v117
    %v381 = vunpack.c.l.b16 %v118
    %v382 = vunpack.c.h.b16 %v118
    %v383 = vunpack.c.l.b16 %v119
    %v384 = vunpack.c.h.b16 %v119
    %v385 = vunpack.c.l.b16 %v120
    %v386 = vunpack.c.h.b16 %v120
    %v387 = vunpack.c.l.b16 %v121
    %v388 = vunpack.c.h.b16 %v121
    %v389 = vunpack.c.l.b16 %v122
    %v390 = vunpack.c.h.b16 %v122
    %v391 = vunpack.c.l.b16 %v123
    %v392 = vunpack.c.h.b16 %v123
    %v393 = vunpack.c.l.b16 %v124
    %v394 = vunpack.c.h.b16 %v124
    %v395 = vunpack.c.l.b16 %v125
    %v396 = vunpack.c.h.b16 %v125
    %v397 = vunpack.c.l.b16 %v126
    %v398 = vunpack.c.h.b16 %v126
    %v399 = vunpack.c.l.b16 %v127
    %v400 = vunpack.c.h.b16 %v127
    %v401 = vunpack.c.l.b16 %v128
    %v402 = vunpack.c.h.b16 %v128
    %v403 = vunpack.c.l.b16 %v129
    %v404 = vunpack.c.h.b16 %v129
    %v405 = vunpack.c.l.b16 %v130
    %v406 = vunpack.c.h.b16 %v130
    %v407 = vunpack.c.l.b16 %v131
    %v408 = vunpack.c.h.b16 %v131
    %v409 = vunpack.c.l.b16 %v132
    %v410 = vunpack.c.h.b16 %v132
    %v411 = vunpack.c.l.b16 %v133
    %v412 = vunpack.c.h.b16 %v133
    %v413 = vunpack.c.l.b16 %v134
    %v414 = vunpack.c.h.b16 %v134
    %v415 = vunpack.c.l.b16 %v135
    %v416 = vunpack.c.h.b16 %v135
    %v417 = vunpack.c.l.b16 %v136
    %v418 = vunpack.c.h.b16 %v136
    %v419 = vunpack.c.l.b16 %v137
    %v420 = vunpack.c.h.b16 %v137
    %v421 = vunpack.c.l.b16 %v138
    %v422 = vunpack.c.h.b16 %v138
    %v423 = vunpack.c.l.b16 %v139
    %v424 = vunpack.c.h.b16 %v139
    %v425 = vunpack.c.l.b16 %v140
    %v426 = vunpack.c.h.b16 %v140
    %v427 = vunpack.c.l.b16 %v141
    %v428 = vunpack.c.h.b16 %v141
    %v429 = vunpack.c.l.b16 %v142
    %v430 = vunpack.c.h.b16 %v142
    %v431 = vpack.c.b16 %v251, %v239
    %v432 = vpack.c.b16 %v252, %v240
    %v433 = vpack.c.b16 %v253, %v241
    %v434 = vpack.c.b16 %v254, %v242
    %v435 = vpack.c.b16 %v255, %v243
    %v436 = vpack.c.b16 %v256, %v244
    %v437 = vpack.c.b16 %v257, %v245
    %v438 = vpack.c.b16 %v258, %v246
    %v439 = vpack.c.b16 %v259, %v247
    %v440 = vpack.c.b16 %v260, %v248
    %v441 = vpack.c.b16 %v261, %v249
    %v442 = vpack.c.b16 %v262, %v250
    %v443 = vpack.c.b16 %v275, %v263
    %v444 = vpack.c.b16 %v276, %v264
    %v445 = vpack.c.b16 %v277, %v265
    %v446 = vpack.c.b16 %v278, %v266
    %v447 = vpack.c.b16 %v279, %v267
    %v448 = vpack.c.b16 %v280, %v268
    %v449 = vpack.c.b16 %v281, %v269
    %v450 = vpack.c.b16 %v282, %v270
    %v451 = vpack.c.b16 %v283, %v271
    %v452 = vpack.c.b16 %v284, %v272
    %v453 = vpack.c.b16 %v285, %v273
    %v454 = vpack.c.b16 %v286, %v274
    %v455 = vpack.c.b16 %v299, %v287
    %v456 = vpack.c.b16 %v300, %v288
    %v457 = vpack.c.b16 %v301, %v289
    %v458 = vpack.c.b16 %v302, %v290
    %v459 = vpack.c.b16 %v303, %v291
    %v460 = vpack.c.b16 %v304, %v292
    %v461 = vpack.c.b16 %v305, %v293
    %v462 = vpack.c.b16 %v306, %v294
    %v463 = vpack.c.b16 %v307, %v295
    %v464 = vpack.c.b16 %v308, %v296
    %v465 = vpack.c.b16 %v309, %v297
    %v466 = vpack.c.b16 %v310, %v298
    %v467 = vpack.c.b16 %v323, %v311
    %v468 = vpack.c.b16 %v324, %v312
    %v469 = vpack.c.b16 %v325, %v313
    %v470 = vpack.c.b16 %v326, %v314
    %v471 = vpack.c.b16 %v327, %v315
    %v472 = vpack.c.b16 %v328, %v316
    %v473 = vpack.c.b16 %v329, %v317
    %v474 = vpack.c.b16 %v330, %v318
    %v475 = vpack.c.b16 %v331, %v319
    %v476 = vpack.c.b16 %v332, %v320
    %v477 = vpack.c.b16 %v333, %v321
    %v478 = vpack.c.b16 %v334, %v322
    %v479 = vpack.c.b16 %v347, %v335
    %v480 = vpack.c.b16 %v348, %v336
    %v481 = vpack.c.b16 %v349, %v337
    %v482 = vpack.c.b16 %v350, %v338
    %v483 = vpack.c.b16 %v351, %v339
    %v484 = vpack.c.b16 %v352, %v340
    %v485 = vpack.c.b16 %v353, %v341
    %v486 = vpack.c.b16 %v354, %v342
    %v487 = vpack.c.b16 %v355, %v343
    %v488 = vpack.c.b16 %v356, %v344
    %v489 = vpack.c.b16 %v357, %v345
    %v490 = vpack.c.b16 %v358, %v346
    %v491 = vpack.c.b16 %v371, %v359
    %v492 = vpack.c.b16 %v372, %v360
    %v493 = vpack.c.b16 %v373, %v361
    %v494 = vpack.c.b16 %v374, %v362
    %v495 = vpack.c.b16 %v375, %v363
    %v496 = vpack.c.b16 %v376, %v364
    %v497 = vpack.c.b16 %v377, %v365
    %v498 = vpack.c.b16 %v378, %v366
    %v499 = vpack.c.b16 %v379, %v367
    %v500 = vpack.c.b16 %v380, %v368
    %v501 = vpack.c.b16 %v381, %v369
    %v502 = vpack.c.b16 %v382, %v370
    %v503 = vpack.c.b16 %v395, %v383
    %v504 = vpack.c.b16 %v396, %v384
    %v505 = vpack.c.b16 %v397, %v385
    %v506 = vpack.c.b16 %v398, %v386
    %v507 = vpack.c.b16 %v399, %v387
    %v508 = vpack.c.b16 %v400, %v388
    %v509 = vpack.c.b16 %v401, %v389
    %v510 = vpack.c.b16 %v402, %v390
    %v511 = vpack.c.b16 %v403, %v391
    %v512 = vpack.c.b16 %v404, %v392
    %v513 = vpack.c.b16 %v405, %v393
    %v514 = vpack.c.b16 %v406, %v394
    %v515 = vpack.c.b16 %v419, %v407
    %v516 = vpack.c.b16 %v420, %v408
    %v517 = vpack.c.b16 %v421, %v409
    %v518 = vpack.c.b16 %v422, %v410
    %v519 = vpack.c.b16 %v423, %v411
    %v520 = vpack.c.b16 %v424, %v412
    %v521 = vpack.c.b16 %v425, %v413
    %v522 = vpack.c.b16 %v426, %v414
    %v523 = vpack.c.b16 %v427, %v415
    %v524 = vpack.c.b16 %v428, %v416
    %v525 = vpack.c.b16 %v429, %v417
    %v526 = vpack.c.b16 %v430, %v418
    %623 = vmatprep.subr.bf16.mxu0 %v432
    %624 = vmatpush1.bf16.msra.mxu0 %v431
    %625 = vmatprep.subr.bf16.mxu0 %v444
    %626 = vmatpush1.bf16.msra.mxu0 %v443
    %627 = vmatprep.subr.bf16.mxu0 %v456
    %628 = vmatpush1.bf16.msra.mxu0 %v455
    %629 = vmatprep.subr.bf16.mxu0 %v468
    %630 = vmatpush1.bf16.msra.mxu0 %v467
    %631 = vmatprep.subr.bf16.mxu0 %v480
    %632 = vmatpush1.bf16.msra.mxu0 %v479
    %633 = vmatprep.subr.bf16.mxu0 %v492
    %634 = vmatpush1.bf16.msra.mxu0 %v491
    %635 = vmatprep.subr.bf16.mxu0 %v504
    %636 = vmatpush1.bf16.msra.mxu0 %v503
    %637 = vmatprep.subr.bf16.mxu0 %v516
    %638 = vmatpush1.bf16.msra.mxu0 %v515
    %639 = vmatprep.subr.bf16.mxu0 0
    %640 = vmatpush1.bf16.msra.mxu0 0
    %641 = vmatprep.subr.bf16.mxu0 0
    %642 = vmatpush1.bf16.msra.mxu0 0
    %643 = vmatprep.subr.bf16.mxu0 0
    %644 = vmatpush1.bf16.msra.mxu0 0
    %645 = vmatprep.subr.bf16.mxu0 0
    %646 = vmatpush1.bf16.msra.mxu0 0
    %647 = vmatprep.subr.bf16.mxu0 0
    %648 = vmatpush1.bf16.msra.mxu0 0
    %649 = vmatprep.subr.bf16.mxu0 0
    %650 = vmatpush1.bf16.msra.mxu0 0
    %651 = vmatprep.subr.bf16.mxu0 0
    %652 = vmatpush1.bf16.msra.mxu0 0
    %653 = vmatprep.subr.bf16.mxu0 0
    %654 = vmatpush1.bf16.msra.mxu0 0
    %655 = vmatprep.mubr.bf16.mxu0 0
    %656 = vmatmul.mubr.bf16.gmra.mrb[0].mxu0 %v45
    %v657 = vpop.f32.mrb[0].mxu0
    %v658 = vadd.f32 0.0, %v657
    %v659 = vpop.f32.mrb[0].mxu0
    %v660 = vadd.f32 0.0, %v659
    %v661 = vpop.f32.mrb[0].mxu0
    %v662 = vadd.f32 0.0, %v661
    %v663 = vpop.f32.mrb[0].mxu0
    %v664 = vadd.f32 0.0, %v663
    %665 = vmatprep.mubr.bf16.mxu0 0
    %666 = vmatmul.mubr.bf16.gmra.mrb[0].mxu0 %v46
    %v667 = vpop.f32.mrb[0].mxu0
    %v668 = vadd.f32 0.0, %v667
    %v669 = vpop.f32.mrb[0].mxu0
    %v670 = vadd.f32 0.0, %v669
    %v671 = vpop.f32.mrb[0].mxu0
    %v672 = vadd.f32 0.0, %v671
    %v673 = vpop.f32.mrb[0].mxu0
    %v674 = vadd.f32 0.0, %v673
    %675 = vdwg.mxu0
    %676 = vmatprep.subr.bf16.mxu0 %v434
    %677 = vmatpush1.bf16.msra.mxu0 %v433
    %678 = vmatprep.subr.bf16.mxu0 %v446
    %679 = vmatpush1.bf16.msra.mxu0 %v445
    %680 = vmatprep.subr.bf16.mxu0 %v458
    %681 = vmatpush1.bf16.msra.mxu0 %v457
    %682 = vmatprep.subr.bf16.mxu0 %v470
    %683 = vmatpush1.bf16.msra.mxu0 %v469
    %684 = vmatprep.subr.bf16.mxu0 %v482
    %685 = vmatpush1.bf16.msra.mxu0 %v481
    %686 = vmatprep.subr.bf16.mxu0 %v494
    %687 = vmatpush1.bf16.msra.mxu0 %v493
    %688 = vmatprep.subr.bf16.mxu0 %v506
    %689 = vmatpush1.bf16.msra.mxu0 %v505
    %690 = vmatprep.subr.bf16.mxu0 %v518
    %691 = vmatpush1.bf16.msra.mxu0 %v517
    %692 = vmatprep.subr.bf16.mxu0 0
    %693 = vmatpush1.bf16.msra.mxu0 0
    %694 = vmatprep.subr.bf16.mxu0 0
    %695 = vmatpush1.bf16.msra.mxu0 0
    %696 = vmatprep.subr.bf16.mxu0 0
    %697 = vmatpush1.bf16.msra.mxu0 0
    %698 = vmatprep.subr.bf16.mxu0 0
    %699 = vmatpush1.bf16.msra.mxu0 0
    %700 = vmatprep.subr.bf16.mxu0 0
    %701 = vmatpush1.bf16.msra.mxu0 0
    %702 = vmatprep.subr.bf16.mxu0 0
    %703 = vmatpush1.bf16.msra.mxu0 0
    %704 = vmatprep.subr.bf16.mxu0 0
    %705 = vmatpush1.bf16.msra.mxu0 0
    %706 = vmatprep.subr.bf16.mxu0 0
    %707 = vmatpush1.bf16.msra.mxu0 0
    %708 = vmatprep.mubr.bf16.mxu0 0
    %709 = vmatmul.mubr.bf16.gmra.mrb[0].mxu0 %v45
    %v710 = vpop.f32.mrb[0].mxu0
    %v711 = vadd.f32 0.0, %v710
    %v712 = vpop.f32.mrb[0].mxu0
    %v713 = vadd.f32 0.0, %v712
    %v714 = vpop.f32.mrb[0].mxu0
    %v715 = vadd.f32 0.0, %v714
    %v716 = vpop.f32.mrb[0].mxu0
    %v717 = vadd.f32 0.0, %v716
    %718 = vmatprep.mubr.bf16.mxu0 0
    %719 = vmatmul.mubr.bf16.gmra.mrb[0].mxu0 %v46
    %v720 = vpop.f32.mrb[0].mxu0
    %v721 = vadd.f32 0.0, %v720
    %v722 = vpop.f32.mrb[0].mxu0
    %v723 = vadd.f32 0.0, %v722
    %v724 = vpop.f32.mrb[0].mxu0
    %v725 = vadd.f32 0.0, %v724
    %v726 = vpop.f32.mrb[0].mxu0
    %v727 = vadd.f32 0.0, %v726
    %728 = vdwg.mxu0
    %729 = vmatprep.subr.bf16.mxu0 %v436
    %730 = vmatpush1.bf16.msra.mxu0 %v435
    %731 = vmatprep.subr.bf16.mxu0 %v448
    %732 = vmatpush1.bf16.msra.mxu0 %v447
    %733 = vmatprep.subr.bf16.mxu0 %v460
    %734 = vmatpush1.bf16.msra.mxu0 %v459
    %735 = vmatprep.subr.bf16.mxu0 %v472
    %736 = vmatpush1.bf16.msra.mxu0 %v471
    %737 = vmatprep.subr.bf16.mxu0 %v484
    %738 = vmatpush1.bf16.msra.mxu0 %v483
    %739 = vmatprep.subr.bf16.mxu0 %v496
    %740 = vmatpush1.bf16.msra.mxu0 %v495
    %741 = vmatprep.subr.bf16.mxu0 %v508
    %742 = vmatpush1.bf16.msra.mxu0 %v507
    %743 = vmatprep.subr.bf16.mxu0 %v520
    %744 = vmatpush1.bf16.msra.mxu0 %v519
    %745 = vmatprep.subr.bf16.mxu0 0
    %746 = vmatpush1.bf16.msra.mxu0 0
    %747 = vmatprep.subr.bf16.mxu0 0
    %748 = vmatpush1.bf16.msra.mxu0 0
    %749 = vmatprep.subr.bf16.mxu0 0
    %750 = vmatpush1.bf16.msra.mxu0 0
    %751 = vmatprep.subr.bf16.mxu0 0
    %752 = vmatpush1.bf16.msra.mxu0 0
    %753 = vmatprep.subr.bf16.mxu0 0
    %754 = vmatpush1.bf16.msra.mxu0 0
    %755 = vmatprep.subr.bf16.mxu0 0
    %756 = vmatpush1.bf16.msra.mxu0 0
    %757 = vmatprep.subr.bf16.mxu0 0
    %758 = vmatpush1.bf16.msra.mxu0 0
    %759 = vmatprep.subr.bf16.mxu0 0
    %760 = vmatpush1.bf16.msra.mxu0 0
    %761 = vmatprep.mubr.bf16.mxu0 0
    %762 = vmatmul.mubr.bf16.gmra.mrb[0].mxu0 %v45
    %v763 = vpop.f32.mrb[0].mxu0
    %v764 = vadd.f32 0.0, %v763
    %v765 = vpop.f32.mrb[0].mxu0
    %v766 = vadd.f32 0.0, %v765
    %v767 = vpop.f32.mrb[0].mxu0
    %v768 = vadd.f32 0.0, %v767
    %v769 = vpop.f32.mrb[0].mxu0
    %v770 = vadd.f32 0.0, %v769
    %771 = vmatprep.mubr.bf16.mxu0 0
    %772 = vmatmul.mubr.bf16.gmra.mrb[0].mxu0 %v46
    %v773 = vpop.f32.mrb[0].mxu0
    %v774 = vadd.f32 0.0, %v773
    %v775 = vpop.f32.mrb[0].mxu0
    %v776 = vadd.f32 0.0, %v775
    %v777 = vpop.f32.mrb[0].mxu0
    %v778 = vadd.f32 0.0, %v777
    %v779 = vpop.f32.mrb[0].mxu0
    %v780 = vadd.f32 0.0, %v779
    %781 = vdwg.mxu0
    %782 = vmatprep.subr.bf16.mxu0 %v438
    %783 = vmatpush1.bf16.msra.mxu0 %v437
    %784 = vmatprep.subr.bf16.mxu0 %v450
    %785 = vmatpush1.bf16.msra.mxu0 %v449
    %786 = vmatprep.subr.bf16.mxu0 %v462
    %787 = vmatpush1.bf16.msra.mxu0 %v461
    %788 = vmatprep.subr.bf16.mxu0 %v474
    %789 = vmatpush1.bf16.msra.mxu0 %v473
    %790 = vmatprep.subr.bf16.mxu0 %v486
    %791 = vmatpush1.bf16.msra.mxu0 %v485
    %792 = vmatprep.subr.bf16.mxu0 %v498
    %793 = vmatpush1.bf16.msra.mxu0 %v497
    %794 = vmatprep.subr.bf16.mxu0 %v510
    %795 = vmatpush1.bf16.msra.mxu0 %v509
    %796 = vmatprep.subr.bf16.mxu0 %v522
    %797 = vmatpush1.bf16.msra.mxu0 %v521
    %798 = vmatprep.subr.bf16.mxu0 0
    %799 = vmatpush1.bf16.msra.mxu0 0
    %800 = vmatprep.subr.bf16.mxu0 0
    %801 = vmatpush1.bf16.msra.mxu0 0
    %802 = vmatprep.subr.bf16.mxu0 0
    %803 = vmatpush1.bf16.msra.mxu0 0
    %804 = vmatprep.subr.bf16.mxu0 0
    %805 = vmatpush1.bf16.msra.mxu0 0
    %806 = vmatprep.subr.bf16.mxu0 0
    %807 = vmatpush1.bf16.msra.mxu0 0
    %808 = vmatprep.subr.bf16.mxu0 0
    %809 = vmatpush1.bf16.msra.mxu0 0
    %810 = vmatprep.subr.bf16.mxu0 0
    %811 = vmatpush1.bf16.msra.mxu0 0
    %812 = vmatprep.subr.bf16.mxu0 0
    %813 = vmatpush1.bf16.msra.mxu0 0
    %814 = vmatprep.mubr.bf16.mxu0 0
    %815 = vmatmul.mubr.bf16.gmra.mrb[0].mxu0 %v45
    %v816 = vpop.f32.mrb[0].mxu0
    %v817 = vadd.f32 0.0, %v816
    %v818 = vpop.f32.mrb[0].mxu0
    %v819 = vadd.f32 0.0, %v818
    %v820 = vpop.f32.mrb[0].mxu0
    %v821 = vadd.f32 0.0, %v820
    %v822 = vpop.f32.mrb[0].mxu0
    %v823 = vadd.f32 0.0, %v822
    %824 = vmatprep.mubr.bf16.mxu0 0
    %825 = vmatmul.mubr.bf16.gmra.mrb[0].mxu0 %v46
    %v826 = vpop.f32.mrb[0].mxu0
    %v827 = vadd.f32 0.0, %v826
    %v828 = vpop.f32.mrb[0].mxu0
    %v829 = vadd.f32 0.0, %v828
    %v830 = vpop.f32.mrb[0].mxu0
    %v831 = vadd.f32 0.0, %v830
    %v832 = vpop.f32.mrb[0].mxu0
    %v833 = vadd.f32 0.0, %v832
    %834 = vdwg.mxu0
    %835 = vmatprep.subr.bf16.mxu0 %v440
    %836 = vmatpush1.bf16.msra.mxu0 %v439
    %837 = vmatprep.subr.bf16.mxu0 %v452
    %838 = vmatpush1.bf16.msra.mxu0 %v451
    %839 = vmatprep.subr.bf16.mxu0 %v464
    %840 = vmatpush1.bf16.msra.mxu0 %v463
    %841 = vmatprep.subr.bf16.mxu0 %v476
    %842 = vmatpush1.bf16.msra.mxu0 %v475
    %843 = vmatprep.subr.bf16.mxu0 %v488
    %844 = vmatpush1.bf16.msra.mxu0 %v487
    %845 = vmatprep.subr.bf16.mxu0 %v500
    %846 = vmatpush1.bf16.msra.mxu0 %v499
    %847 = vmatprep.subr.bf16.mxu0 %v512
    %848 = vmatpush1.bf16.msra.mxu0 %v511
    %849 = vmatprep.subr.bf16.mxu0 %v524
    %850 = vmatpush1.bf16.msra.mxu0 %v523
    %851 = vmatprep.subr.bf16.mxu0 0
    %852 = vmatpush1.bf16.msra.mxu0 0
    %853 = vmatprep.subr.bf16.mxu0 0
    %854 = vmatpush1.bf16.msra.mxu0 0
    %855 = vmatprep.subr.bf16.mxu0 0
    %856 = vmatpush1.bf16.msra.mxu0 0
    %857 = vmatprep.subr.bf16.mxu0 0
    %858 = vmatpush1.bf16.msra.mxu0 0
    %859 = vmatprep.subr.bf16.mxu0 0
    %860 = vmatpush1.bf16.msra.mxu0 0
    %861 = vmatprep.subr.bf16.mxu0 0
    %862 = vmatpush1.bf16.msra.mxu0 0
    %863 = vmatprep.subr.bf16.mxu0 0
    %864 = vmatpush1.bf16.msra.mxu0 0
    %865 = vmatprep.subr.bf16.mxu0 0
    %866 = vmatpush1.bf16.msra.mxu0 0
    %867 = vmatprep.mubr.bf16.mxu0 0
    %868 = vmatmul.mubr.bf16.gmra.mrb[0].mxu0 %v45
    %v869 = vpop.f32.mrb[0].mxu0
    %v870 = vadd.f32 0.0, %v869
    %v871 = vpop.f32.mrb[0].mxu0
    %v872 = vadd.f32 0.0, %v871
    %v873 = vpop.f32.mrb[0].mxu0
    %v874 = vadd.f32 0.0, %v873
    %v875 = vpop.f32.mrb[0].mxu0
    %v876 = vadd.f32 0.0, %v875
    %877 = vmatprep.mubr.bf16.mxu0 0
    %878 = vmatmul.mubr.bf16.gmra.mrb[0].mxu0 %v46
    %v879 = vpop.f32.mrb[0].mxu0
    %v880 = vadd.f32 0.0, %v879
    %v881 = vpop.f32.mrb[0].mxu0
    %v882 = vadd.f32 0.0, %v881
    %v883 = vpop.f32.mrb[0].mxu0
    %v884 = vadd.f32 0.0, %v883
    %v885 = vpop.f32.mrb[0].mxu0
    %v886 = vadd.f32 0.0, %v885
    %887 = vdwg.mxu0
    %888 = vmatprep.subr.bf16.mxu0 %v442
    %889 = vmatpush1.bf16.msra.mxu0 %v441
    %890 = vmatprep.subr.bf16.mxu0 %v454
    %891 = vmatpush1.bf16.msra.mxu0 %v453
    %892 = vmatprep.subr.bf16.mxu0 %v466
    %893 = vmatpush1.bf16.msra.mxu0 %v465
    %894 = vmatprep.subr.bf16.mxu0 %v478
    %895 = vmatpush1.bf16.msra.mxu0 %v477
    %896 = vmatprep.subr.bf16.mxu0 %v490
    %897 = vmatpush1.bf16.msra.mxu0 %v489
    %898 = vmatprep.subr.bf16.mxu0 %v502
    %899 = vmatpush1.bf16.msra.mxu0 %v501
    %900 = vmatprep.subr.bf16.mxu0 %v514
    %901 = vmatpush1.bf16.msra.mxu0 %v513
    %902 = vmatprep.subr.bf16.mxu0 %v526
    %903 = vmatpush1.bf16.msra.mxu0 %v525
    %904 = vmatprep.subr.bf16.mxu0 0
    %905 = vmatpush1.bf16.msra.mxu0 0
    %906 = vmatprep.subr.bf16.mxu0 0
    %907 = vmatpush1.bf16.msra.mxu0 0
    %908 = vmatprep.subr.bf16.mxu0 0
    %909 = vmatpush1.bf16.msra.mxu0 0
    %910 = vmatprep.subr.bf16.mxu0 0
    %911 = vmatpush1.bf16.msra.mxu0 0
    %912 = vmatprep.subr.bf16.mxu0 0
    %913 = vmatpush1.bf16.msra.mxu0 0
    %914 = vmatprep.subr.bf16.mxu0 0
    %915 = vmatpush1.bf16.msra.mxu0 0
    %916 = vmatprep.subr.bf16.mxu0 0
    %917 = vmatpush1.bf16.msra.mxu0 0
    %918 = vmatprep.subr.bf16.mxu0 0
    %919 = vmatpush1.bf16.msra.mxu0 0
    %920 = vmatprep.mubr.bf16.mxu0 0
    %921 = vmatmul.mubr.bf16.gmra.mrb[0].mxu0 %v45
    %v922 = vpop.f32.mrb[0].mxu0
    %v923 = vadd.f32 0.0, %v922
    %v924 = vpop.f32.mrb[0].mxu0
    %v925 = vadd.f32 0.0, %v924
    %v926 = vpop.f32.mrb[0].mxu0
    %v927 = vadd.f32 0.0, %v926
    %v928 = vpop.f32.mrb[0].mxu0
    %v929 = vadd.f32 0.0, %v928
    %930 = vmatprep.mubr.bf16.mxu0 0
    %931 = vmatmul.mubr.bf16.gmra.mrb[0].mxu0 %v46
    %v932 = vpop.f32.mrb[0].mxu0
    %v933 = vadd.f32 0.0, %v932
    %v934 = vpop.f32.mrb[0].mxu0
    %v935 = vadd.f32 0.0, %v934
    %v936 = vpop.f32.mrb[0].mxu0
    %v937 = vadd.f32 0.0, %v936
    %v938 = vpop.f32.mrb[0].mxu0
    %v939 = vadd.f32 0.0, %v938
    %940 = vdwg.mxu0
    %v941 = vpack.c.bf16 %v662, %v658
    %v942 = vpack.c.bf16 %v664, %v660
    %v943 = vpack.c.bf16 %v715, %v711
    %v944 = vpack.c.bf16 %v717, %v713
    %v945 = vpack.c.bf16 %v768, %v764
    %v946 = vpack.c.bf16 %v770, %v766
    %v947 = vpack.c.bf16 %v821, %v817
    %v948 = vpack.c.bf16 %v823, %v819
    %v949 = vpack.c.bf16 %v874, %v870
    %v950 = vpack.c.bf16 %v876, %v872
    %v951 = vpack.c.bf16 %v927, %v923
    %v952 = vpack.c.bf16 %v929, %v925
    %v953 = vpack.c.bf16 %v672, %v668
    %v954 = vpack.c.bf16 %v674, %v670
    %v955 = vpack.c.bf16 %v725, %v721
    %v956 = vpack.c.bf16 %v727, %v723
    %v957 = vpack.c.bf16 %v778, %v774
    %v958 = vpack.c.bf16 %v780, %v776
    %v959 = vpack.c.bf16 %v831, %v827
    %v960 = vpack.c.bf16 %v833, %v829
    %v961 = vpack.c.bf16 %v884, %v880
    %v962 = vpack.c.bf16 %v886, %v882
    %v963 = vpack.c.bf16 %v937, %v933
    %v964 = vpack.c.bf16 %v939, %v935
    %v989 = vunpack.c.l.b16 %v941
    %v990 = vunpack.c.l.b16 %v942
    %v991 = vunpack.c.l.b16 %v943
    %v992 = vunpack.c.l.b16 %v944
    %v993 = vunpack.c.l.b16 %v945
    %v994 = vunpack.c.l.b16 %v946
    %v995 = vunpack.c.l.b16 %v947
    %v996 = vunpack.c.l.b16 %v948
    %v997 = vunpack.c.l.b16 %v949
    %v998 = vunpack.c.l.b16 %v950
    %v999 = vunpack.c.l.b16 %v951
    %v1000 = vunpack.c.l.b16 %v952
    %v1001 = vunpack.c.h.b16 %v941
    %v1002 = vunpack.c.h.b16 %v942
    %v1003 = vunpack.c.h.b16 %v943
    %v1004 = vunpack.c.h.b16 %v944
    %v1005 = vunpack.c.h.b16 %v945
    %v1006 = vunpack.c.h.b16 %v946
    %v1007 = vunpack.c.h.b16 %v947
    %v1008 = vunpack.c.h.b16 %v948
    %v1009 = vunpack.c.h.b16 %v949
    %v1010 = vunpack.c.h.b16 %v950
    %v1011 = vunpack.c.h.b16 %v951
    %v1012 = vunpack.c.h.b16 %v952
    %v1013 = vunpack.c.l.b16 %v953
    %v1014 = vunpack.c.l.b16 %v954
    %v1015 = vunpack.c.l.b16 %v955
    %v1016 = vunpack.c.l.b16 %v956
    %v1017 = vunpack.c.l.b16 %v957
    %v1018 = vunpack.c.l.b16 %v958
    %v1019 = vunpack.c.l.b16 %v959
    %v1020 = vunpack.c.l.b16 %v960
    %v1021 = vunpack.c.l.b16 %v961
    %v1022 = vunpack.c.l.b16 %v962
    %v1023 = vunpack.c.l.b16 %v963
    %v1024 = vunpack.c.l.b16 %v964
    %v1025 = vunpack.c.h.b16 %v953
    %v1026 = vunpack.c.h.b16 %v954
    %v1027 = vunpack.c.h.b16 %v955
    %v1028 = vunpack.c.h.b16 %v956
    %v1029 = vunpack.c.h.b16 %v957
    %v1030 = vunpack.c.h.b16 %v958
    %v1031 = vunpack.c.h.b16 %v959
    %v1032 = vunpack.c.h.b16 %v960
    %v1033 = vunpack.c.h.b16 %v961
    %v1034 = vunpack.c.h.b16 %v962
    %v1035 = vunpack.c.h.b16 %v963
    %v1036 = vunpack.c.h.b16 %v964
    %v1037 = vpack.c.b16 %v990, %v989
    %v1038 = vpack.c.b16 %v992, %v991
    %v1039 = vpack.c.b16 %v994, %v993
    %v1040 = vpack.c.b16 %v996, %v995
    %v1041 = vpack.c.b16 %v998, %v997
    %v1042 = vpack.c.b16 %v1000, %v999
    %v1043 = vpack.c.b16 %v1002, %v1001
    %v1044 = vpack.c.b16 %v1004, %v1003
    %v1045 = vpack.c.b16 %v1006, %v1005
    %v1046 = vpack.c.b16 %v1008, %v1007
    %v1047 = vpack.c.b16 %v1010, %v1009
    %v1048 = vpack.c.b16 %v1012, %v1011
    %v1049 = vpack.c.b16 %v1014, %v1013
    %v1050 = vpack.c.b16 %v1016, %v1015
    %v1051 = vpack.c.b16 %v1018, %v1017
    %v1052 = vpack.c.b16 %v1020, %v1019
    %v1053 = vpack.c.b16 %v1022, %v1021
    %v1054 = vpack.c.b16 %v1024, %v1023
    %v1055 = vpack.c.b16 %v1026, %v1025
    %v1056 = vpack.c.b16 %v1028, %v1027
    %v1057 = vpack.c.b16 %v1030, %v1029
    %v1058 = vpack.c.b16 %v1032, %v1031
    %v1059 = vpack.c.b16 %v1034, %v1033
    %v1060 = vpack.c.b16 %v1036, %v1035
    %1085 = vst [vmem:[#allocation7] sm:$0xff] %v1037
    %1086 = vst [vmem:[#allocation7 + $0x8] sm:$0xff] %v1038
    %1087 = vst [vmem:[#allocation7 + $0x10] sm:$0xff] %v1039
    %1088 = vst [vmem:[#allocation7 + $0x18] sm:$0xff] %v1040
    %1089 = vst [vmem:[#allocation7 + $0x20] sm:$0xff] %v1041
    %1090 = vst [vmem:[#allocation7 + $0x28] sm:$0xff] %v1042
    %1091 = vst [vmem:[#allocation7 + $0x30] sm:$0xff] %v1043
    %1092 = vst [vmem:[#allocation7 + $0x38] sm:$0xff] %v1044
    %1093 = vst [vmem:[#allocation7 + $0x40] sm:$0xff] %v1045
    %1094 = vst [vmem:[#allocation7 + $0x48] sm:$0xff] %v1046
    %1095 = vst [vmem:[#allocation7 + $0x50] sm:$0xff] %v1047
    %1096 = vst [vmem:[#allocation7 + $0x58] sm:$0xff] %v1048
    %1097 = vst [vmem:[#allocation7 + $0x60] sm:$0xff] %v1049
    %1098 = vst [vmem:[#allocation7 + $0x68] sm:$0xff] %v1050
    %1099 = vst [vmem:[#allocation7 + $0x70] sm:$0xff] %v1051
    %1100 = vst [vmem:[#allocation7 + $0x78] sm:$0xff] %v1052
    %1101 = vst [vmem:[#allocation7 + $0x80] sm:$0xff] %v1053
    %1102 = vst [vmem:[#allocation7 + $0x88] sm:$0xff] %v1054
    %1103 = vst [vmem:[#allocation7 + $0x90] sm:$0xff] %v1055
    %1104 = vst [vmem:[#allocation7 + $0x98] sm:$0xff] %v1056
    %1105 = vst [vmem:[#allocation7 + $0xa0] sm:$0xff] %v1057
    %1106 = vst [vmem:[#allocation7 + $0xa8] sm:$0xff] %v1058
    %1107 = vst [vmem:[#allocation7 + $0xb0] sm:$0xff] %v1059
    %1108 = vst [vmem:[#allocation7 + $0xb8] sm:$0xff] %v1060
    // Predicated region
    $region18: #{tpu_custom_call.1} parent=1 // pred_check
      _
    $region19: #{tpu_custom_call.1} parent=1 // pred_check_branch
      %1110 = sbr.rel (0) target = $region21
    $region20: #{tpu_custom_call.1} parent=1 // pred_region
      %s1112 = ssub.s32 3072, 3072
      %1113 = vsyncadd [#allocation4], %s1112
      %s1114 = sshll.u32 [#allocation7], 4
      %s1115 = int_to_ptr.vmem [resolvable:$true] %s1114
      %1120 = dma.vmem_to_hbm [thread:$0]  %s1115, 3072, %s2, [#allocation4], 768, 768, 48
    $region21: #{tpu_custom_call.1} parent=1 // pred_fallthru
      _
    // Predicated region
    $region22: #{tpu_custom_call.1} parent=1 // pred_check
      _
    $region23: #{tpu_custom_call.1} parent=1 // pred_check_branch
      %1122 = sbr.rel (0) target = $region25
    $region24: #{tpu_custom_call.1} parent=1 // pred_region
      %1123 = dma.done [#allocation4], 3072
    $region25: #{tpu_custom_call.1} parent=1 // pred_fallthru
      _
    %1124 = vsyncpa [#allocation3], 1
    %1125 = vsyncpa [#allocation6], 1
    %1126 = vsyncpa [#allocation4], 1

</llo_original>
